<compile_context>
chip_gen: v7x
topology: tpu7x:2x2x1
jax: 0.10.0
libtpu: 0.0.40
codegen_flags: <defaults>
</compile_context>

<pallas_src>
import jax
import jax.numpy as jnp
from jax.experimental import pallas as pl
from jax.experimental.pallas import tpu as pltpu

_LANE = 128


def _softplus(x):
    # Matches torch.nn.functional.softplus (beta=1, threshold=20).
    return jnp.where(x > 20.0, x, jnp.log1p(jnp.exp(jnp.minimum(x, 20.0))))


def _round_up(n, m):
    return ((n + m - 1) // m) * m


def _reparam_kernel(wmu_ref, wsig_ref, weps_ref, bmu_ref, bsig_ref, beps_ref,
                    w_ref, b_ref):
    """One-shot reparameterized sample of weight / bias.

    Hoisted out of the per-batch conv grid so softplus/mul/add run once,
    not once per batch element, and so the conv kernel only DMAs a single
    (bf16) weight tile.
    """
    w = wmu_ref[...] + _softplus(wsig_ref[...]) * weps_ref[...]
    w_ref[...] = w.astype(w_ref.dtype)
    b = bmu_ref[...] + _softplus(bsig_ref[...]) * beps_ref[...]
    b_ref[...] = b.astype(b_ref.dtype)


def _bayes_conv1d_kernel(x_ref, w_ref, b_ref, o_ref, xw_ref, xcol_ref):
    # x_ref    : (1, C_in, L)       input row for this batch element
    # w_ref    : (C_out, K*C_in)    sampled weight, im2col layout (compute dtype)
    # b_ref    : (C_out, 1)         sampled bias (f32)
    # o_ref    : (1, C_out, Lout)   Lout = round_up(L, 128): lane-dense store
    # xw_ref   : (C_in, Wx)         f32 scratch: zero-extended ('same'-padded) x
    # xcol_ref : (K*C_in, Lout)     f32 scratch: im2col matrix
    _, C_in, L = x_ref.shape
    KC, Lout = xcol_ref.shape
    K = KC // C_in
    pad_l = (K - 1) // 2

    # In-kernel 'same' padding: zero the scratch, place x at lane offset pad_l.
    xw_ref[...] = jnp.zeros_like(xw_ref)
    xw_ref[:, pad_l:pad_l + L] = x_ref[0].astype(xw_ref.dtype)

    # im2col build: the K shifted tap windows, each read at the full lane-
    # aligned width Lout (multiple of 128) and written straight into the
    # contraction-stacked scratch.  K is small & static -> unrolled at trace.
    for k in range(K):
        xcol_ref[k * C_in:(k + 1) * C_in, :] = xw_ref[:, k:k + Lout]

    # One deep matmul on the MXU: (C_out, K*C_in) x (K*C_in, Lout), f32 acc.
    acc = jnp.dot(w_ref[...], xcol_ref[...].astype(w_ref.dtype),
                  preferred_element_type=jnp.float32)
    # Single bias-add pass, then an unmasked lane-dense store (Lout % 128 == 0).
    o_ref[0] = (acc + b_ref[...]).astype(o_ref.dtype)


def bayesian_conv1d(x, weight_mu, weight_sigma, bias_mu, bias_sigma,
                    eps_w, eps_b, *, sample=True,
                    compute_dtype=jnp.bfloat16):
    """Pallas implementation of BayesianConv1d.forward (stride=1, 'same')."""
    N, C_in, L = x.shape
    C_out, _, K = weight_mu.shape
    KC = K * C_in

    if not sample:
        eps_w = jnp.zeros_like(eps_w)
        eps_b = jnp.zeros_like(eps_b)

    # Lane-dense output width and padded-x scratch width.
    Lout = _round_up(L, _LANE)
    Wx = Lout + (_round_up(K - 1, _LANE) if K > 1 else 0)

    # Glue: lay weight params out in im2col order (C_out, K*C_in), tap index
    # major, matching the row order of the in-kernel im2col build.
    to_col = lambda a: jnp.transpose(a, (0, 2, 1)).reshape(C_out, KC)
    w_mu_c, w_sig_c, w_eps_c = to_col(weight_mu), to_col(weight_sigma), to_col(eps_w)
    b_mu_2d = bias_mu.reshape(C_out, 1)
    b_sig_2d = bias_sigma.reshape(C_out, 1)
    b_eps_2d = eps_b.reshape(C_out, 1)

    # 1) Reparameterized weight/bias sample: one tiny grid-of-1 Pallas call.
    w_full = pl.BlockSpec((C_out, KC), lambda i: (0, 0))
    b_full = pl.BlockSpec((C_out, 1), lambda i: (0, 0))
    w_col, b_col = pl.pallas_call(
        _reparam_kernel,
        out_shape=(jax.ShapeDtypeStruct((C_out, KC), compute_dtype),
                   jax.ShapeDtypeStruct((C_out, 1), jnp.float32)),
        grid_spec=pltpu.PrefetchScalarGridSpec(
            num_scalar_prefetch=0,
            grid=(1,),
            in_specs=[w_full, w_full, w_full, b_full, b_full, b_full],
            out_specs=(w_full, b_full),
        ),
    )(w_mu_c, w_sig_c, w_eps_c, b_mu_2d, b_sig_2d, b_eps_2d)

    # 2) Convolution: grid over the batch ('parallel' -> megacore sharding on
    #    v7x).  Weight/bias block indices are constant across the grid, so
    #    they stay resident in VMEM and are not re-DMA'd per step.
    out = pl.pallas_call(
        _bayes_conv1d_kernel,
        out_shape=jax.ShapeDtypeStruct((N, C_out, Lout), x.dtype),
        grid_spec=pltpu.PrefetchScalarGridSpec(
            num_scalar_prefetch=0,
            grid=(N,),
            in_specs=[
                pl.BlockSpec((1, C_in, L), lambda n: (n, 0, 0)),
                pl.BlockSpec((C_out, KC), lambda n: (0, 0)),
                pl.BlockSpec((C_out, 1), lambda n: (0, 0)),
            ],
            out_specs=pl.BlockSpec((1, C_out, Lout), lambda n: (n, 0, 0)),
            scratch_shapes=[
                pltpu.VMEM((C_in, Wx), jnp.float32),
                pltpu.VMEM((KC, Lout), jnp.float32),
            ],
        ),
        compiler_params=pltpu.CompilerParams(
            dimension_semantics=("parallel",)),
    )(x, w_col, b_col)

    return out[:, :, :L]


if __name__ == "__main__":
    # Small shapes consistent with the module.
    N, C_in, C_out, K, L = 2, 4, 8, 3, 16
    key = jax.random.PRNGKey(0)
    k_x, k_wmu, k_bmu, k_ew, k_eb = jax.random.split(key, 5)

    # Deterministic parameter init mirroring init_parameters():
    #   kaiming_uniform_(weight_mu, mode='fan_in') -> U(-b, b), b = sqrt(6/fan_in)
    #   uniform_(bias_mu, -0.2, 0.2); constant_(weight_sigma, -5); constant_(bias_sigma, -5)
    fan_in = C_in * K
    bound = (6.0 / fan_in) ** 0.5
    weight_mu = jax.random.uniform(k_wmu, (C_out, C_in, K), jnp.float32,
                                   minval=-bound, maxval=bound)
    weight_sigma = jnp.full((C_out, C_in, K), -5.0, jnp.float32)
    bias_mu = jax.random.uniform(k_bmu, (C_out,), jnp.float32,
                                 minval=-0.2, maxval=0.2)
    bias_sigma = jnp.full((C_out,), -5.0, jnp.float32)

    # Gaussian noise for the reparameterized sample (deterministic here).
    eps_w = jax.random.normal(k_ew, (C_out, C_in, K), jnp.float32)
    eps_b = jax.random.normal(k_eb, (C_out,), jnp.float32)

    x = jax.random.normal(k_x, (N, C_in, L), jnp.float32)

    y = bayesian_conv1d(x, weight_mu, weight_sigma, bias_mu, bias_sigma,
                        eps_w, eps_b, sample=True)
    y = jax.block_until_ready(y)

    # Pure-JAX reference of the same math (f32 reparam sample, bf16 MXU
    # operands, f32 accumulation) to match the kernel's compute_dtype path.
    w_sampled = weight_mu + _softplus(weight_sigma) * eps_w
    b_sampled = bias_mu + _softplus(bias_sigma) * eps_b
    y_ref = jax.lax.conv_general_dilated(
        x.astype(jnp.bfloat16),
        w_sampled.astype(jnp.bfloat16),
        window_strides=(1,), padding="SAME",
        dimension_numbers=("NCH", "OIH", "NCH"),
        preferred_element_type=jnp.float32) + b_sampled[None, :, None]

    assert y.shape == (N, C_out, L)
    assert jnp.allclose(y, y_ref, atol=1e-3, rtol=1e-3), \
        float(jnp.max(jnp.abs(y - y_ref)))

    print("KERNEL_OK")
</pallas_src>

<mosaic_0001>
module attributes {stable_mosaic.version = 11 : i64} {
  func.func @_reparam_kernel(%arg0: i32, %arg1: memref<8x12xf32, #tpu.memory_space<vmem>>, %arg2: memref<8x12xf32, #tpu.memory_space<vmem>>, %arg3: memref<8x12xf32, #tpu.memory_space<vmem>>, %arg4: memref<8x1xf32, #tpu.memory_space<vmem>>, %arg5: memref<8x1xf32, #tpu.memory_space<vmem>>, %arg6: memref<8x1xf32, #tpu.memory_space<vmem>>, %arg7: memref<8x12xbf16, #tpu.memory_space<vmem>>, %arg8: memref<8x1xf32, #tpu.memory_space<vmem>>) attributes {dimension_semantics = [#tpu.dimension_semantics<arbitrary>], iteration_bounds = array<i64: 1>, scalar_prefetch = 0 : i64, scratch_operands = 0 : i64, tpu.core_type = #tpu.core_type<tc>, window_params = [{pipeline_mode = #tpu.pipeline_mode<synchronous>, transform_indices = @transform_0, window_bounds = array<i64: 8, 12>}, {pipeline_mode = #tpu.pipeline_mode<synchronous>, transform_indices = @transform_1, window_bounds = array<i64: 8, 12>}, {pipeline_mode = #tpu.pipeline_mode<synchronous>, transform_indices = @transform_2, window_bounds = array<i64: 8, 12>}, {pipeline_mode = #tpu.pipeline_mode<synchronous>, transform_indices = @transform_3, window_bounds = array<i64: 8, 1>}, {pipeline_mode = #tpu.pipeline_mode<synchronous>, transform_indices = @transform_4, window_bounds = array<i64: 8, 1>}, {pipeline_mode = #tpu.pipeline_mode<synchronous>, transform_indices = @transform_5, window_bounds = array<i64: 8, 1>}, {pipeline_mode = #tpu.pipeline_mode<synchronous>, transform_indices = @transform_6, window_bounds = array<i64: 8, 12>}, {pipeline_mode = #tpu.pipeline_mode<synchronous>, transform_indices = @transform_7, window_bounds = array<i64: 8, 1>}]} {
    %c0 = arith.constant 0 : index
    %c0_0 = arith.constant 0 : index
    %0 = vector.load %arg1[%c0, %c0_0] : memref<8x12xf32, #tpu.memory_space<vmem>>, vector<8x12xf32>
    %c0_1 = arith.constant 0 : index
    %c0_2 = arith.constant 0 : index
    %1 = vector.load %arg2[%c0_1, %c0_2] : memref<8x12xf32, #tpu.memory_space<vmem>>, vector<8x12xf32>
    %cst = arith.constant 2.000000e+01 : f32
    %2 = vector.broadcast %cst : f32 to vector<8x12xf32>
    %3 = arith.cmpf ogt, %1, %2 : vector<8x12xf32>
    %cst_3 = arith.constant 2.000000e+01 : f32
    %4 = vector.broadcast %cst_3 : f32 to vector<8x12xf32>
    %5 = arith.minimumf %1, %4 : vector<8x12xf32>
    %6 = math.exp %5 : vector<8x12xf32>
    %7 = math.log1p %6 : vector<8x12xf32>
    %8 = arith.select %3, %1, %7 : vector<8x12xi1>, vector<8x12xf32>
    %c0_4 = arith.constant 0 : index
    %c0_5 = arith.constant 0 : index
    %9 = vector.load %arg3[%c0_4, %c0_5] : memref<8x12xf32, #tpu.memory_space<vmem>>, vector<8x12xf32>
    %10 = arith.mulf %8, %9 : vector<8x12xf32>
    %11 = arith.addf %0, %10 : vector<8x12xf32>
    %12 = arith.truncf %11 : vector<8x12xf32> to vector<8x12xbf16>
    %c0_6 = arith.constant 0 : index
    %c0_7 = arith.constant 0 : index
    %13 = vector.load %arg7[%c0_6, %c0_7] : memref<8x12xbf16, #tpu.memory_space<vmem>>, vector<8x12xbf16>
    tpu.vector_store %arg7[%c0_6, %c0_7], %12 {strides = array<i32>} : memref<8x12xbf16, #tpu.memory_space<vmem>>, vector<8x12xbf16>,
    %c0_8 = arith.constant 0 : index
    %c0_9 = arith.constant 0 : index
    %14 = vector.load %arg4[%c0_8, %c0_9] : memref<8x1xf32, #tpu.memory_space<vmem>>, vector<8x1xf32>
    %c0_10 = arith.constant 0 : index
    %c0_11 = arith.constant 0 : index
    %15 = vector.load %arg5[%c0_10, %c0_11] : memref<8x1xf32, #tpu.memory_space<vmem>>, vector<8x1xf32>
    %cst_12 = arith.constant 2.000000e+01 : f32
    %16 = vector.broadcast %cst_12 : f32 to vector<8x1xf32>
    %17 = arith.cmpf ogt, %15, %16 : vector<8x1xf32>
    %cst_13 = arith.constant 2.000000e+01 : f32
    %18 = vector.broadcast %cst_13 : f32 to vector<8x1xf32>
    %19 = arith.minimumf %15, %18 : vector<8x1xf32>
    %20 = math.exp %19 : vector<8x1xf32>
    %21 = math.log1p %20 : vector<8x1xf32>
    %22 = arith.select %17, %15, %21 : vector<8x1xi1>, vector<8x1xf32>
    %c0_14 = arith.constant 0 : index
    %c0_15 = arith.constant 0 : index
    %23 = vector.load %arg6[%c0_14, %c0_15] : memref<8x1xf32, #tpu.memory_space<vmem>>, vector<8x1xf32>
    %24 = arith.mulf %22, %23 : vector<8x1xf32>
    %25 = arith.addf %14, %24 : vector<8x1xf32>
    %c0_16 = arith.constant 0 : index
    %c0_17 = arith.constant 0 : index
    %26 = vector.load %arg8[%c0_16, %c0_17] : memref<8x1xf32, #tpu.memory_space<vmem>>, vector<8x1xf32>
    tpu.vector_store %arg8[%c0_16, %c0_17], %25 {strides = array<i32>} : memref<8x1xf32, #tpu.memory_space<vmem>>, vector<8x1xf32>,
    return
  }
  func.func @transform_0(%arg0: i32) -> (i32, i32) {
    %c0_i32 = arith.constant 0 : i32
    %c0_i32_0 = arith.constant 0 : i32
    %c0_i32_1 = arith.constant 0 : i32
    return %c0_i32, %c0_i32_0 : i32, i32
  }
  func.func @transform_1(%arg0: i32) -> (i32, i32) {
    %c0_i32 = arith.constant 0 : i32
    %c0_i32_0 = arith.constant 0 : i32
    %c0_i32_1 = arith.constant 0 : i32
    return %c0_i32, %c0_i32_0 : i32, i32
  }
  func.func @transform_2(%arg0: i32) -> (i32, i32) {
    %c0_i32 = arith.constant 0 : i32
    %c0_i32_0 = arith.constant 0 : i32
    %c0_i32_1 = arith.constant 0 : i32
    return %c0_i32, %c0_i32_0 : i32, i32
  }
  func.func @transform_3(%arg0: i32) -> (i32, i32) {
    %c0_i32 = arith.constant 0 : i32
    %c0_i32_0 = arith.constant 0 : i32
    %c0_i32_1 = arith.constant 0 : i32
    return %c0_i32, %c0_i32_0 : i32, i32
  }
  func.func @transform_4(%arg0: i32) -> (i32, i32) {
    %c0_i32 = arith.constant 0 : i32
    %c0_i32_0 = arith.constant 0 : i32
    %c0_i32_1 = arith.constant 0 : i32
    return %c0_i32, %c0_i32_0 : i32, i32
  }
  func.func @transform_5(%arg0: i32) -> (i32, i32) {
    %c0_i32 = arith.constant 0 : i32
    %c0_i32_0 = arith.constant 0 : i32
    %c0_i32_1 = arith.constant 0 : i32
    return %c0_i32, %c0_i32_0 : i32, i32
  }
  func.func @transform_6(%arg0: i32) -> (i32, i32) {
    %c0_i32 = arith.constant 0 : i32
    %c0_i32_0 = arith.constant 0 : i32
    %c0_i32_1 = arith.constant 0 : i32
    return %c0_i32, %c0_i32_0 : i32, i32
  }
  func.func @transform_7(%arg0: i32) -> (i32, i32) {
    %c0_i32 = arith.constant 0 : i32
    %c0_i32_0 = arith.constant 0 : i32
    %c0_i32_1 = arith.constant 0 : i32
    return %c0_i32, %c0_i32_0 : i32, i32
  }
}

</mosaic_0001>

<llo_original>
// kernel: tpu_custom_call.1
$region0: #{tpu_custom_call.1}
  #allocation0 [shape = 'u32[]', space=smem, size = 0x4, offset = 0x4, fixed_abs, tag = 'smem constant byte address 0x4 - core index']
  #allocation1 [shape = 'u32[144,128]{1,0:T(1,128)}', space=vmem, size = 0x12000, scoped, tag = 'internal scratch']
  %s0 = inlined_call_operand.vmem [shape: f32[8,12], index: 0, kind: input, shape index: {}]
  %s1 = inlined_call_operand.vmem [shape: f32[8,12], index: 1, kind: input, shape index: {}]
  %s2 = inlined_call_operand.vmem [shape: f32[8,12], index: 2, kind: input, shape index: {}]
  %s3 = inlined_call_operand.vmem [shape: f32[8,1], index: 3, kind: input, shape index: {}]
  %s4 = inlined_call_operand.vmem [shape: f32[8,1], index: 4, kind: input, shape index: {}]
  %s5 = inlined_call_operand.vmem [shape: f32[8,1], index: 5, kind: input, shape index: {}]
  %s6 = inlined_call_operand.hbm [shape: bf16[8,12], index: 6, kind: output, shape index: {0}]
  %s7 = inlined_call_operand.vmem [shape: f32[8,1], index: 7, kind: output, shape index: {1}]
  %8 = xla_tuple %s6, %s7
  %s9 = sld [smem:[#allocation0]]
  $region42: #{tpu_custom_call.1} parent=0
    _
  %s11 = ssub.s32 1, %s9
  %s12 = scalar_select 0, %s11, %s9
  $region1: #{tpu_custom_call.1} parent=0
    #allocation2 [shape = 'u8[2048]{0}', space=vmem, size = 0x800, scoped, tag = 'output window, operand 0, single buffered']
    #allocation3 [shape = 's32[1]{0}', space=sflag, size = 0x4, scoped, tag = 'scoped memory for tpu_custom_call.1']
    %13 = vsyncpa [#allocation3], 0
    // Predicated region
    $region2: #{tpu_custom_call.1} parent=1 // pred_check
      _
    $region3: #{tpu_custom_call.1} parent=1 // pred_check_branch
      %15 = sbr.rel (0) target = $region5
    $region4: #{tpu_custom_call.1} parent=1 // pred_region
      _
    $region5: #{tpu_custom_call.1} parent=1 // pred_fallthru
      _
    // Predicated region
    $region6: #{tpu_custom_call.1} parent=1 // pred_check
      _
    $region7: #{tpu_custom_call.1} parent=1 // pred_check_branch
      %17 = sbr.rel (0) target = $region9
    $region8: #{tpu_custom_call.1} parent=1 // pred_region
      _
    $region9: #{tpu_custom_call.1} parent=1 // pred_fallthru
      _
    // Predicated region
    $region10: #{tpu_custom_call.1} parent=1 // pred_check
      _
    $region11: #{tpu_custom_call.1} parent=1 // pred_check_branch
      %19 = sbr.rel (0) target = $region13
    $region12: #{tpu_custom_call.1} parent=1 // pred_region
      _
    $region13: #{tpu_custom_call.1} parent=1 // pred_fallthru
      _
    // Predicated region
    $region14: #{tpu_custom_call.1} parent=1 // pred_check
      _
    $region15: #{tpu_custom_call.1} parent=1 // pred_check_branch
      %21 = sbr.rel (0) target = $region17
    $region16: #{tpu_custom_call.1} parent=1 // pred_region
      _
    $region17: #{tpu_custom_call.1} parent=1 // pred_fallthru
      _
    // Predicated region
    $region18: #{tpu_custom_call.1} parent=1 // pred_check
      _
    $region19: #{tpu_custom_call.1} parent=1 // pred_check_branch
      %23 = sbr.rel (0) target = $region21
    $region20: #{tpu_custom_call.1} parent=1 // pred_region
      _
    $region21: #{tpu_custom_call.1} parent=1 // pred_fallthru
      _
    // Predicated region
    $region22: #{tpu_custom_call.1} parent=1 // pred_check
      _
    $region23: #{tpu_custom_call.1} parent=1 // pred_check_branch
      %25 = sbr.rel (0) target = $region25
    $region24: #{tpu_custom_call.1} parent=1 // pred_region
      _
    $region25: #{tpu_custom_call.1} parent=1 // pred_fallthru
      _
    %v26 = vld [vmem:[%s0] sm:$0xff]
    %v27 = vld [vmem:[%s1] sm:$0xff]
    %vm28 = vcmp.gt.f32.partialorder %v27, 20.0
    %v29 = vmin.f32 %v27, 20.0
    %v30 = vmul.f32 %v29, 1.442695
    %v31 = vpow.pop %v30
    %v32 = vadd.f32 %v31, 1.0
    %v33 = vlog2.pop %v32
    %v34 = vmul.f32 %v33, 0.6931472
    %v35 = vmul.f32 -0.5, %v31
    %v36 = vadd.f32 %v35, 1.0
    %v37 = vmul.f32 %v36, %v31
    %v38 = vand.u32 2147483647, %v31
    %vm39 = vcmp.lt.f32.partialorder %v38, 0.0004427343
    %v40 = vsel %vm39, %v37, %v34
    %v41 = vsel %vm28, %v27, %v40
    %v42 = vld [vmem:[%s2] sm:$0xff]
    %v43 = vmul.f32 %v41, %v42
    %v44 = vadd.f32 %v26, %v43
    %v45 = vpack.c.bf16 %v44, %v44
    %vm46 = vcmask 93184
    %47 = vst.msk [vmem:[#allocation2] sm:$0xf] %vm46, %v45
    %v48 = vld [vmem:[%s3] sm:$0xff]
    %v49 = vld [vmem:[%s4] sm:$0xff]
    %vm50 = vcmp.gt.f32.partialorder %v49, 20.0
    %v51 = vmin.f32 %v49, 20.0
    %v52 = vmul.f32 %v51, 1.442695
    %v53 = vpow.pop %v52
    %v54 = vadd.f32 %v53, 1.0
    %v55 = vlog2.pop %v54
    %v56 = vmul.f32 %v55, 0.6931472
    %v57 = vmul.f32 -0.5, %v53
    %v58 = vadd.f32 %v57, 1.0
    %v59 = vmul.f32 %v58, %v53
    %v60 = vand.u32 2147483647, %v53
    %vm61 = vcmp.lt.f32.partialorder %v60, 0.0004427343
    %v62 = vsel %vm61, %v59, %v56
    %v63 = vsel %vm50, %v49, %v62
    %v64 = vld [vmem:[%s5] sm:$0xff]
    %v65 = vmul.f32 %v63, %v64
    %v66 = vadd.f32 %v48, %v65
    %vm67 = vcmask 7168
    %68 = vst.msk [vmem:[%s7] sm:$0xff] %vm67, %v66
    // Predicated region
    $region26: #{tpu_custom_call.1} parent=1 // pred_check
      _
    $region27: #{tpu_custom_call.1} parent=1 // pred_check_branch
      %70 = sbr.rel (0) target = $region29
    $region28: #{tpu_custom_call.1} parent=1 // pred_region
      %s72 = ssub.s32 64, 64
      %73 = vsyncadd [#allocation3], %s72
      %s75 = sshll.u32 [#allocation2], 4
      %s76 = int_to_ptr.vmem [resolvable:$true] %s75
      %78 = dma.vmem_to_hbm [thread:$0]  %s76, 64, %s6, [#allocation3]
    $region29: #{tpu_custom_call.1} parent=1 // pred_fallthru
      _
    // Predicated region
    $region30: #{tpu_custom_call.1} parent=1 // pred_check
      _
    $region31: #{tpu_custom_call.1} parent=1 // pred_check_branch
      %80 = sbr.rel (0) target = $region33
    $region32: #{tpu_custom_call.1} parent=1 // pred_region
      _
    $region33: #{tpu_custom_call.1} parent=1 // pred_fallthru
      _
    // Predicated region
    $region34: #{tpu_custom_call.1} parent=1 // pred_check
      _
    $region35: #{tpu_custom_call.1} parent=1 // pred_check_branch
      %82 = sbr.rel (0) target = $region37
    $region36: #{tpu_custom_call.1} parent=1 // pred_region
      %83 = dma.done [#allocation3], 64
    $region37: #{tpu_custom_call.1} parent=1 // pred_fallthru
      _
    // Predicated region
    $region38: #{tpu_custom_call.1} parent=1 // pred_check
      _
    $region39: #{tpu_custom_call.1} parent=1 // pred_check_branch
      %85 = sbr.rel (0) target = $region41
    $region40: #{tpu_custom_call.1} parent=1 // pred_region
      _
    $region41: #{tpu_custom_call.1} parent=1 // pred_fallthru
      _
    %86 = vsyncpa [#allocation3], 1

</llo_original>
